<compile_context>
chip_gen: v7x
topology: tpu7x:2x2x1
jax: 0.10.0
libtpu: 0.0.40
codegen_flags: <defaults>
</compile_context>

<pallas_src>
import jax
import jax.numpy as jnp
from jax.experimental import pallas as pl
from jax.experimental.pallas import tpu as pltpu


def _round_up(v, m):
    return ((v + m - 1) // m) * m


# ---------------------------------------------------------------------------
# Kernels (operate on one batch tile; weights resident in VMEM)
# ---------------------------------------------------------------------------
def _relu_block_kernel_with_t(x_ref, w1_ref, b1_ref, t_ref, w2_ref, b2_ref, o_ref):
    h = jnp.dot(x_ref[...], w1_ref[...], preferred_element_type=jnp.float32)
    h = jnp.maximum(h + b1_ref[...], 0.0)                       # ReLU
    te = jnp.dot(t_ref[...], w2_ref[...], preferred_element_type=jnp.float32)
    o_ref[...] = (h + te + b2_ref[...]).astype(o_ref.dtype)     # single fused store


def _relu_block_kernel_no_t(x_ref, w1_ref, b1_ref, o_ref):
    h = jnp.dot(x_ref[...], w1_ref[...], preferred_element_type=jnp.float32)
    o_ref[...] = jnp.maximum(h + b1_ref[...], 0.0).astype(o_ref.dtype)


# ---------------------------------------------------------------------------
# Wrapper
# ---------------------------------------------------------------------------
def relu_block(x, params, t=None, *, tile_n=512):
    """Pallas implementation of ReluBlock.forward.

    x: [N, in_channels] float32
    t: [N, time_dim] float32 or None
    params: dict with w_lin [Cin, Cout], b_lin [1, Cout],
                      w_dense [Tdim, Cout], b_dense [1, Cout]
    returns: [N, out_channels] float32
    """
    n, c_in = x.shape
    c_out = params["w_lin"].shape[1]

    # --- padded, lane/sublane-friendly shapes -------------------------------
    c_out_p = _round_up(c_out, 128)              # lane-dense output last dim
    tn = min(tile_n, _round_up(n, 8))            # batch tile (sublane multiple)
    n_p = _round_up(n, tn)
    grid = (n_p // tn,)

    xp = x if n_p == n else jnp.pad(x, ((0, n_p - n), (0, 0)))
    w1, b1 = params["w_lin"], params["b_lin"]
    if c_out_p != c_out:
        w1 = jnp.pad(w1, ((0, 0), (0, c_out_p - c_out)))
        b1 = jnp.pad(b1, ((0, 0), (0, c_out_p - c_out)))

    out_shape = jax.ShapeDtypeStruct((n_p, c_out_p), x.dtype)

    x_spec = pl.BlockSpec((tn, c_in), lambda i: (i, 0))
    w1_spec = pl.BlockSpec((c_in, c_out_p), lambda i: (0, 0))   # resident
    b1_spec = pl.BlockSpec((1, c_out_p), lambda i: (0, 0))      # resident
    out_spec = pl.BlockSpec((tn, c_out_p), lambda i: (i, 0))

    compiler_params = pltpu.CompilerParams(
        dimension_semantics=("parallel",))

    if t is None:
        flops = 2 * n_p * c_in * c_out_p
        bytes_accessed = 4 * (xp.size + w1.size + b1.size + n_p * c_out_p)
        out = pl.pallas_call(
            _relu_block_kernel_no_t,
            out_shape=out_shape,
            grid=grid,
            in_specs=[x_spec, w1_spec, b1_spec],
            out_specs=out_spec,
            compiler_params=compiler_params,
            cost_estimate=pl.CostEstimate(
                flops=flops, transcendentals=0, bytes_accessed=bytes_accessed),
        )(xp, w1, b1)
        return out[:n, :c_out]

    t_dim = t.shape[1]
    tp = t if n_p == n else jnp.pad(t, ((0, n_p - n), (0, 0)))
    w2, b2 = params["w_dense"], params["b_dense"]
    if c_out_p != c_out:
        w2 = jnp.pad(w2, ((0, 0), (0, c_out_p - c_out)))
        b2 = jnp.pad(b2, ((0, 0), (0, c_out_p - c_out)))

    t_spec = pl.BlockSpec((tn, t_dim), lambda i: (i, 0))
    w2_spec = pl.BlockSpec((t_dim, c_out_p), lambda i: (0, 0))  # resident
    b2_spec = pl.BlockSpec((1, c_out_p), lambda i: (0, 0))      # resident

    flops = 2 * n_p * (c_in + t_dim) * c_out_p
    bytes_accessed = 4 * (xp.size + tp.size + w1.size + b1.size
                          + w2.size + b2.size + n_p * c_out_p)

    out = pl.pallas_call(
        _relu_block_kernel_with_t,
        out_shape=out_shape,
        grid=grid,
        in_specs=[x_spec, w1_spec, b1_spec, t_spec, w2_spec, b2_spec],
        out_specs=out_spec,
        compiler_params=compiler_params,
        cost_estimate=pl.CostEstimate(
            flops=flops, transcendentals=0, bytes_accessed=bytes_accessed),
    )(xp, w1, b1, tp, w2, b2)
    return out[:n, :c_out]


# ---------------------------------------------------------------------------
# Deterministic parameter init (mimics torch.nn.Linear default: U(-1/sqrt(fan_in), +))
# ---------------------------------------------------------------------------
def init_params(key, in_channels, out_channels, time_dim):
    k1, k2, k3, k4 = jax.random.split(key, 4)
    lim1 = 1.0 / jnp.sqrt(in_channels)
    lim2 = 1.0 / jnp.sqrt(time_dim)
    return {
        # stored transposed relative to torch ([out,in]) -> [in,out] for row-major matmul
        "w_lin": jax.random.uniform(k1, (in_channels, out_channels), jnp.float32, -lim1, lim1),
        "b_lin": jax.random.uniform(k2, (1, out_channels), jnp.float32, -lim1, lim1),
        "w_dense": jax.random.uniform(k3, (time_dim, out_channels), jnp.float32, -lim2, lim2),
        "b_dense": jax.random.uniform(k4, (1, out_channels), jnp.float32, -lim2, lim2),
    }


def _reference(x, params, t=None):
    h = jnp.maximum(x @ params["w_lin"] + params["b_lin"], 0.0)
    if t is not None:
        h = h + (t @ params["w_dense"] + params["b_dense"])
    return h


# ---------------------------------------------------------------------------
# Demo
# ---------------------------------------------------------------------------
if __name__ == "__main__":
    key = jax.random.PRNGKey(0)

    # small shapes consistent with the module
    N, IN_CH, OUT_CH, T_DIM = 8, 32, 64, 16
    kx, kt, kp = jax.random.split(key, 3)
    x = jax.random.normal(kx, (N, IN_CH), jnp.float32)
    t = jax.random.normal(kt, (N, T_DIM), jnp.float32)
    params = init_params(kp, IN_CH, OUT_CH, T_DIM)

    out = jax.block_until_ready(relu_block(x, params, t))
    ref = _reference(x, params, t)
    assert out.shape == (N, OUT_CH)
    assert jnp.allclose(out, ref, atol=1e-5, rtol=1e-5)

    out_no_t = jax.block_until_ready(relu_block(x, params, None))
    ref_no_t = _reference(x, params, None)
    assert jnp.allclose(out_no_t, ref_no_t, atol=1e-5, rtol=1e-5)

    # second case exercising the multi-tile grid + batch padding path
    N2 = 520
    kx2, kt2 = jax.random.split(jax.random.PRNGKey(1), 2)
    x2 = jax.random.normal(kx2, (N2, IN_CH), jnp.float32)
    t2 = jax.random.normal(kt2, (N2, T_DIM), jnp.float32)
    out2 = jax.block_until_ready(relu_block(x2, params, t2, tile_n=512))
    ref2 = _reference(x2, params, t2)
    assert out2.shape == (N2, OUT_CH)
    assert jnp.allclose(out2, ref2, atol=1e-5, rtol=1e-5)

    print("KERNEL_OK")
</pallas_src>

<mosaic_0001>
module attributes {stable_mosaic.version = 11 : i64} {
  func.func @_relu_block_kernel_with_t(%arg0: i32, %arg1: memref<8x32xf32, #tpu.memory_space<vmem>>, %arg2: memref<32x128xf32, #tpu.memory_space<vmem>>, %arg3: memref<1x128xf32, #tpu.memory_space<vmem>>, %arg4: memref<8x16xf32, #tpu.memory_space<vmem>>, %arg5: memref<16x128xf32, #tpu.memory_space<vmem>>, %arg6: memref<1x128xf32, #tpu.memory_space<vmem>>, %arg7: memref<8x128xf32, #tpu.memory_space<vmem>>) attributes {dimension_semantics = [#tpu.dimension_semantics<parallel>], iteration_bounds = array<i64: 1>, scalar_prefetch = 0 : i64, scratch_operands = 0 : i64, tpu.core_type = #tpu.core_type<tc>, window_params = [{transform_indices = @transform_0, window_bounds = array<i64: 8, 32>}, {pipeline_mode = #tpu.pipeline_mode<synchronous>, transform_indices = @transform_1, window_bounds = array<i64: 32, 128>}, {pipeline_mode = #tpu.pipeline_mode<synchronous>, transform_indices = @transform_2, window_bounds = array<i64: 1, 128>}, {transform_indices = @transform_3, window_bounds = array<i64: 8, 16>}, {pipeline_mode = #tpu.pipeline_mode<synchronous>, transform_indices = @transform_4, window_bounds = array<i64: 16, 128>}, {pipeline_mode = #tpu.pipeline_mode<synchronous>, transform_indices = @transform_5, window_bounds = array<i64: 1, 128>}, {transform_indices = @transform_6, window_bounds = array<i64: 8, 128>}]} {
    %c0 = arith.constant 0 : index
    %c0_0 = arith.constant 0 : index
    %0 = vector.load %arg1[%c0, %c0_0] : memref<8x32xf32, #tpu.memory_space<vmem>>, vector<8x32xf32>
    %c0_1 = arith.constant 0 : index
    %c0_2 = arith.constant 0 : index
    %1 = vector.load %arg2[%c0_1, %c0_2] : memref<32x128xf32, #tpu.memory_space<vmem>>, vector<32x128xf32>
    %cst = arith.constant dense<0.000000e+00> : vector<8x128xf32>
    %2 = tpu.matmul %0, %1, %cst {dimension_numbers = #tpu.dot_dimension_numbers<[1], [0], [0], [1], [0, 0, 1, 1], [], []>} : vector<8x32xf32>, vector<32x128xf32>, vector<8x128xf32> -> vector<8x128xf32>
    %c0_3 = arith.constant 0 : index
    %c0_4 = arith.constant 0 : index
    %3 = vector.load %arg3[%c0_3, %c0_4] : memref<1x128xf32, #tpu.memory_space<vmem>>, vector<1x128xf32>
    %4 = vector.broadcast %3 : vector<1x128xf32> to vector<8x128xf32>
    %5 = arith.addf %2, %4 : vector<8x128xf32>
    %cst_5 = arith.constant 0.000000e+00 : f32
    %6 = vector.broadcast %cst_5 : f32 to vector<8x128xf32>
    %7 = arith.maximumf %5, %6 : vector<8x128xf32>
    %c0_6 = arith.constant 0 : index
    %c0_7 = arith.constant 0 : index
    %8 = vector.load %arg4[%c0_6, %c0_7] : memref<8x16xf32, #tpu.memory_space<vmem>>, vector<8x16xf32>
    %c0_8 = arith.constant 0 : index
    %c0_9 = arith.constant 0 : index
    %9 = vector.load %arg5[%c0_8, %c0_9] : memref<16x128xf32, #tpu.memory_space<vmem>>, vector<16x128xf32>
    %cst_10 = arith.constant dense<0.000000e+00> : vector<8x128xf32>
    %10 = tpu.matmul %8, %9, %cst_10 {dimension_numbers = #tpu.dot_dimension_numbers<[1], [0], [0], [1], [0, 0, 1, 1], [], []>} : vector<8x16xf32>, vector<16x128xf32>, vector<8x128xf32> -> vector<8x128xf32>
    %11 = arith.addf %7, %10 : vector<8x128xf32>
    %c0_11 = arith.constant 0 : index
    %c0_12 = arith.constant 0 : index
    %12 = vector.load %arg6[%c0_11, %c0_12] : memref<1x128xf32, #tpu.memory_space<vmem>>, vector<1x128xf32>
    %13 = vector.broadcast %12 : vector<1x128xf32> to vector<8x128xf32>
    %14 = arith.addf %11, %13 : vector<8x128xf32>
    %c0_13 = arith.constant 0 : index
    %c0_14 = arith.constant 0 : index
    %15 = vector.load %arg7[%c0_13, %c0_14] : memref<8x128xf32, #tpu.memory_space<vmem>>, vector<8x128xf32>
    tpu.vector_store %arg7[%c0_13, %c0_14], %14 {strides = array<i32>} : memref<8x128xf32, #tpu.memory_space<vmem>>, vector<8x128xf32>,
    return
  }
  func.func @transform_0(%arg0: i32) -> (i32, i32) {
    %c0_i32 = arith.constant 0 : i32
    %c0_i32_0 = arith.constant 0 : i32
    return %arg0, %c0_i32 : i32, i32
  }
  func.func @transform_1(%arg0: i32) -> (i32, i32) {
    %c0_i32 = arith.constant 0 : i32
    %c0_i32_0 = arith.constant 0 : i32
    %c0_i32_1 = arith.constant 0 : i32
    return %c0_i32, %c0_i32_0 : i32, i32
  }
  func.func @transform_2(%arg0: i32) -> (i32, i32) {
    %c0_i32 = arith.constant 0 : i32
    %c0_i32_0 = arith.constant 0 : i32
    %c0_i32_1 = arith.constant 0 : i32
    return %c0_i32, %c0_i32_0 : i32, i32
  }
  func.func @transform_3(%arg0: i32) -> (i32, i32) {
    %c0_i32 = arith.constant 0 : i32
    %c0_i32_0 = arith.constant 0 : i32
    return %arg0, %c0_i32 : i32, i32
  }
  func.func @transform_4(%arg0: i32) -> (i32, i32) {
    %c0_i32 = arith.constant 0 : i32
    %c0_i32_0 = arith.constant 0 : i32
    %c0_i32_1 = arith.constant 0 : i32
    return %c0_i32, %c0_i32_0 : i32, i32
  }
  func.func @transform_5(%arg0: i32) -> (i32, i32) {
    %c0_i32 = arith.constant 0 : i32
    %c0_i32_0 = arith.constant 0 : i32
    %c0_i32_1 = arith.constant 0 : i32
    return %c0_i32, %c0_i32_0 : i32, i32
  }
  func.func @transform_6(%arg0: i32) -> (i32, i32) {
    %c0_i32 = arith.constant 0 : i32
    %c0_i32_0 = arith.constant 0 : i32
    return %arg0, %c0_i32 : i32, i32
  }
}

</mosaic_0001>

<llo_original>
// kernel: tpu_custom_call.1
$region0: #{tpu_custom_call.1}
  #allocation0 [shape = 'u32[]', space=smem, size = 0x4, offset = 0x4, fixed_abs, tag = 'smem constant byte address 0x4 - core index']
  #allocation1 [shape = 'u32[144,128]{1,0:T(1,128)}', space=vmem, size = 0x12000, scoped, tag = 'internal scratch']
  %s0 = inlined_call_operand.hbm [shape: f32[8,32], index: 0, kind: input, shape index: {}]
  %s1 = inlined_call_operand.hbm [shape: f32[32,128], index: 1, kind: input, shape index: {}]
  %s2 = inlined_call_operand.vmem [shape: f32[1,128], index: 2, kind: input, shape index: {}]
  %s3 = inlined_call_operand.vmem [shape: f32[8,16], index: 3, kind: input, shape index: {}]
  %s4 = inlined_call_operand.hbm [shape: f32[16,128], index: 4, kind: input, shape index: {}]
  %s5 = inlined_call_operand.vmem [shape: f32[1,128], index: 5, kind: input, shape index: {}]
  %s6 = inlined_call_operand.hbm [shape: f32[8,128], index: 6, kind: output, shape index: {}]
  %s7 = sld [smem:[#allocation0]]
  $region46: #{tpu_custom_call.1} parent=0
    _
  %s9 = ssub.s32 1, %s7
  %s10 = scalar_select 0, %s9, %s7
  $region1: #{tpu_custom_call.1} parent=0
    #allocation2 [shape = 'u8[4096]{0}', space=vmem, size = 0x1000, scoped, tag = 'input window, operand 0, single buffered']
    #allocation3 [shape = 's32[1]{0}', space=sflag, size = 0x4, scoped, tag = 'scoped memory for tpu_custom_call.1']
    #allocation4 [shape = 's32[1]{0}', space=sflag, size = 0x4, scoped, tag = 'scoped memory for tpu_custom_call.1']
    #allocation5 [shape = 'u8[16384]{0}', space=vmem, size = 0x4000, scoped, tag = 'input window, operand 1, single buffered']
    #allocation6 [shape = 's32[1]{0}', space=sflag, size = 0x4, scoped, tag = 'scoped memory for tpu_custom_call.1']
    #allocation7 [shape = 'u8[8192]{0}', space=vmem, size = 0x2000, scoped, tag = 'input window, operand 4, single buffered']
    #allocation8 [shape = 'u8[4096]{0}', space=vmem, size = 0x1000, scoped, tag = 'output window, operand 0, single buffered']
    %11 = vsyncpa [#allocation3], 0
    %12 = vsyncpa [#allocation6], 0
    %13 = vsyncpa [#allocation4], 0
    // Predicated region
    $region2: #{tpu_custom_call.1} parent=1 // pred_check
      _
    $region3: #{tpu_custom_call.1} parent=1 // pred_check_branch
      %15 = sbr.rel (0) target = $region5
    $region4: #{tpu_custom_call.1} parent=1 // pred_region
      %s17 = ssub.s32 128, 128
      %18 = vsyncadd [#allocation3], %s17
      %s20 = sshll.u32 [#allocation2], 4
      %s21 = int_to_ptr.vmem [resolvable:$true] %s20
      %23 = dma.hbm_to_vmem [thread:$0]  %s0, 128, %s21, [#allocation3]
    $region5: #{tpu_custom_call.1} parent=1 // pred_fallthru
      _
    // Predicated region
    $region6: #{tpu_custom_call.1} parent=1 // pred_check
      _
    $region7: #{tpu_custom_call.1} parent=1 // pred_check_branch
      %25 = sbr.rel (0) target = $region9
    $region8: #{tpu_custom_call.1} parent=1 // pred_region
      %s27 = ssub.s32 512, 512
      %28 = vsyncadd [#allocation6], %s27
      %s29 = sshll.u32 [#allocation5], 4
      %s30 = int_to_ptr.vmem [resolvable:$true] %s29
      %35 = dma.hbm_to_vmem [thread:$0]  %s1, 512, %s30, [#allocation6], 128, 128, 8
    $region9: #{tpu_custom_call.1} parent=1 // pred_fallthru
      _
    // Predicated region
    $region10: #{tpu_custom_call.1} parent=1 // pred_check
      _
    $region11: #{tpu_custom_call.1} parent=1 // pred_check_branch
      %37 = sbr.rel (0) target = $region13
    $region12: #{tpu_custom_call.1} parent=1 // pred_region
      _
    $region13: #{tpu_custom_call.1} parent=1 // pred_fallthru
      _
    // Predicated region
    $region14: #{tpu_custom_call.1} parent=1 // pred_check
      _
    $region15: #{tpu_custom_call.1} parent=1 // pred_check_branch
      %39 = sbr.rel (0) target = $region17
    $region16: #{tpu_custom_call.1} parent=1 // pred_region
      _
    $region17: #{tpu_custom_call.1} parent=1 // pred_fallthru
      _
    // Predicated region
    $region18: #{tpu_custom_call.1} parent=1 // pred_check
      _
    $region19: #{tpu_custom_call.1} parent=1 // pred_check_branch
      %41 = sbr.rel (0) target = $region21
    $region20: #{tpu_custom_call.1} parent=1 // pred_region
      %s43 = ssub.s32 256, 256
      %44 = vsyncadd [#allocation6], %s43
      %s45 = sshll.u32 [#allocation7], 4
      %s46 = int_to_ptr.vmem [resolvable:$true] %s45
      %51 = dma.hbm_to_vmem [thread:$0]  %s4, 256, %s46, [#allocation6], 128, 128, 8
    $region21: #{tpu_custom_call.1} parent=1 // pred_fallthru
      _
    // Predicated region
    $region22: #{tpu_custom_call.1} parent=1 // pred_check
      _
    $region23: #{tpu_custom_call.1} parent=1 // pred_check_branch
      %53 = sbr.rel (0) target = $region25
    $region24: #{tpu_custom_call.1} parent=1 // pred_region
      _
    $region25: #{tpu_custom_call.1} parent=1 // pred_fallthru
      _
    // Predicated region
    $region26: #{tpu_custom_call.1} parent=1 // pred_check
      _
    $region27: #{tpu_custom_call.1} parent=1 // pred_check_branch
      %55 = sbr.rel (0) target = $region29
    $region28: #{tpu_custom_call.1} parent=1 // pred_region
      %56 = dma.done [#allocation3], 128
    $region29: #{tpu_custom_call.1} parent=1 // pred_fallthru
      _
    // Predicated region
    $region30: #{tpu_custom_call.1} parent=1 // pred_check
      _
    $region31: #{tpu_custom_call.1} parent=1 // pred_check_branch
      %58 = sbr.rel (0) target = $region33
    $region32: #{tpu_custom_call.1} parent=1 // pred_region
      %59 = dma.done [#allocation6], 512
    $region33: #{tpu_custom_call.1} parent=1 // pred_fallthru
      _
    // Predicated region
    $region34: #{tpu_custom_call.1} parent=1 // pred_check
      _
    $region35: #{tpu_custom_call.1} parent=1 // pred_check_branch
      %61 = sbr.rel (0) target = $region37
    $region36: #{tpu_custom_call.1} parent=1 // pred_region
      %62 = dma.done [#allocation6], 256
    $region37: #{tpu_custom_call.1} parent=1 // pred_fallthru
      _
    %v63 = vld [vmem:[#allocation2] sm:$0xff]
    %v64 = vld [vmem:[#allocation5] sm:$0xff]
    %v65 = vld [vmem:[#allocation5 + $0x8] sm:$0xff]
    %v66 = vld [vmem:[#allocation5 + $0x10] sm:$0xff]
    %v67 = vld [vmem:[#allocation5 + $0x18] sm:$0xff]
    %v68 = vld [vmem:[%s2] sm:$0x1]
    %v70 = vlaneseq
    %v71 = vshrl.u32 %v70, 7
    %v72 = vsub.s32 0, %v71
    %v73 = vrot.slane %v68, %v72
    %vm75 = vcmask 261120
    %v77 = vsel %vm75, %v63, 0
    %79 = vmatprep.subr.mxu0 0.0
    %80 = vmatpush1.msra.mxu0 %v64
    %81 = vmatprep.subr.mxu0 0.0
    %82 = vmatpush1.msra.mxu0 %v65
    %83 = vmatprep.subr.mxu0 0.0
    %84 = vmatpush1.msra.mxu0 %v66
    %85 = vmatprep.subr.mxu0 0.0
    %86 = vmatpush1.msra.mxu0 %v67
    %87 = vmatprep.subr.mxu0 0.0
    %88 = vmatpush1.msra.mxu0 0.0
    %89 = vmatprep.subr.mxu0 0.0
    %90 = vmatpush1.msra.mxu0 0.0
    %91 = vmatprep.subr.mxu0 0.0
    %92 = vmatpush1.msra.mxu0 0.0
    %93 = vmatprep.subr.mxu0 0.0
    %94 = vmatpush1.msra.mxu0 0.0
    %95 = vmatprep.subr.mxu0 0.0
    %96 = vmatpush1.msra.mxu0 0.0
    %97 = vmatprep.subr.mxu0 0.0
    %98 = vmatpush1.msra.mxu0 0.0
    %99 = vmatprep.subr.mxu0 0.0
    %100 = vmatpush1.msra.mxu0 0.0
    %101 = vmatprep.subr.mxu0 0.0
    %102 = vmatpush1.msra.mxu0 0.0
    %103 = vmatprep.subr.mxu0 0.0
    %104 = vmatpush1.msra.mxu0 0.0
    %105 = vmatprep.subr.mxu0 0.0
    %106 = vmatpush1.msra.mxu0 0.0
    %107 = vmatprep.subr.mxu0 0.0
    %108 = vmatpush1.msra.mxu0 0.0
    %109 = vmatprep.subr.mxu0 0.0
    %110 = vmatpush1.msra.mxu0 0.0
    %111 = vmatprep.subr.mxu0 0.0
    %112 = vmatpush1.msra.mxu0 0.0
    %113 = vmatprep.subr.mxu0 0.0
    %114 = vmatpush1.msra.mxu0 0.0
    %115 = vmatprep.subr.mxu0 0.0
    %116 = vmatpush1.msra.mxu0 0.0
    %117 = vmatprep.subr.mxu0 0.0
    %118 = vmatpush1.msra.mxu0 0.0
    %119 = vmatprep.subr.mxu0 0.0
    %120 = vmatpush1.msra.mxu0 0.0
    %121 = vmatprep.subr.mxu0 0.0
    %122 = vmatpush1.msra.mxu0 0.0
    %123 = vmatprep.subr.mxu0 0.0
    %124 = vmatpush1.msra.mxu0 0.0
    %125 = vmatprep.subr.mxu0 0.0
    %126 = vmatpush1.msra.mxu0 0.0
    %127 = vmatprep.subr.mxu0 0.0
    %128 = vmatpush1.msra.mxu0 0.0
    %129 = vmatprep.subr.mxu0 0.0
    %130 = vmatpush1.msra.mxu0 0.0
    %131 = vmatprep.subr.mxu0 0.0
    %132 = vmatpush1.msra.mxu0 0.0
    %133 = vmatprep.subr.mxu0 0.0
    %134 = vmatpush1.msra.mxu0 0.0
    %135 = vmatprep.subr.mxu0 0.0
    %136 = vmatpush1.msra.mxu0 0.0
    %137 = vmatprep.subr.mxu0 0.0
    %138 = vmatpush1.msra.mxu0 0.0
    %139 = vmatprep.subr.mxu0 0.0
    %140 = vmatpush1.msra.mxu0 0.0
    %141 = vmatprep.subr.mxu0 0.0
    %142 = vmatpush1.msra.mxu0 0.0
    %143 = vmatprep.mubr.f32.mxu0 0.0
    %144 = vmatmul.mubr.f32.gmra.mrb[0].mxu0 %v77
    %v145 = vpop.f32.mrb[0].mxu0
    %v146 = vadd.f32 %v73, %v145
    %v147 = vpop.f32.mrb[0].mxu0
    %148 = vdwg.mxu0
    %v149 = vmax.f32 %v146, 0.0
    %v150 = vld [vmem:[%s3] sm:$0xff]
    %v151 = vld [vmem:[#allocation7] sm:$0xff]
    %v152 = vld [vmem:[#allocation7 + $0x8] sm:$0xff]
    %vm153 = vcmask 130048
    %v155 = vsel %vm153, %v150, 0
    %157 = vmatprep.subr.mxu0 0.0
    %158 = vmatpush1.msra.mxu0 %v151
    %159 = vmatprep.subr.mxu0 0.0
    %160 = vmatpush1.msra.mxu0 %v152
    %161 = vmatprep.subr.mxu0 0.0
    %162 = vmatpush1.msra.mxu0 0.0
    %163 = vmatprep.subr.mxu0 0.0
    %164 = vmatpush1.msra.mxu0 0.0
    %165 = vmatprep.subr.mxu0 0.0
    %166 = vmatpush1.msra.mxu0 0.0
    %167 = vmatprep.subr.mxu0 0.0
    %168 = vmatpush1.msra.mxu0 0.0
    %169 = vmatprep.subr.mxu0 0.0
    %170 = vmatpush1.msra.mxu0 0.0
    %171 = vmatprep.subr.mxu0 0.0
    %172 = vmatpush1.msra.mxu0 0.0
    %173 = vmatprep.subr.mxu0 0.0
    %174 = vmatpush1.msra.mxu0 0.0
    %175 = vmatprep.subr.mxu0 0.0
    %176 = vmatpush1.msra.mxu0 0.0
    %177 = vmatprep.subr.mxu0 0.0
    %178 = vmatpush1.msra.mxu0 0.0
    %179 = vmatprep.subr.mxu0 0.0
    %180 = vmatpush1.msra.mxu0 0.0
    %181 = vmatprep.subr.mxu0 0.0
    %182 = vmatpush1.msra.mxu0 0.0
    %183 = vmatprep.subr.mxu0 0.0
    %184 = vmatpush1.msra.mxu0 0.0
    %185 = vmatprep.subr.mxu0 0.0
    %186 = vmatpush1.msra.mxu0 0.0
    %187 = vmatprep.subr.mxu0 0.0
    %188 = vmatpush1.msra.mxu0 0.0
    %189 = vmatprep.subr.mxu0 0.0
    %190 = vmatpush1.msra.mxu0 0.0
    %191 = vmatprep.subr.mxu0 0.0
    %192 = vmatpush1.msra.mxu0 0.0
    %193 = vmatprep.subr.mxu0 0.0
    %194 = vmatpush1.msra.mxu0 0.0
    %195 = vmatprep.subr.mxu0 0.0
    %196 = vmatpush1.msra.mxu0 0.0
    %197 = vmatprep.subr.mxu0 0.0
    %198 = vmatpush1.msra.mxu0 0.0
    %199 = vmatprep.subr.mxu0 0.0
    %200 = vmatpush1.msra.mxu0 0.0
    %201 = vmatprep.subr.mxu0 0.0
    %202 = vmatpush1.msra.mxu0 0.0
    %203 = vmatprep.subr.mxu0 0.0
    %204 = vmatpush1.msra.mxu0 0.0
    %205 = vmatprep.subr.mxu0 0.0
    %206 = vmatpush1.msra.mxu0 0.0
    %207 = vmatprep.subr.mxu0 0.0
    %208 = vmatpush1.msra.mxu0 0.0
    %209 = vmatprep.subr.mxu0 0.0
    %210 = vmatpush1.msra.mxu0 0.0
    %211 = vmatprep.subr.mxu0 0.0
    %212 = vmatpush1.msra.mxu0 0.0
    %213 = vmatprep.subr.mxu0 0.0
    %214 = vmatpush1.msra.mxu0 0.0
    %215 = vmatprep.subr.mxu0 0.0
    %216 = vmatpush1.msra.mxu0 0.0
    %217 = vmatprep.subr.mxu0 0.0
    %218 = vmatpush1.msra.mxu0 0.0
    %219 = vmatprep.subr.mxu0 0.0
    %220 = vmatpush1.msra.mxu0 0.0
    %221 = vmatprep.mubr.f32.mxu0 0.0
    %222 = vmatmul.mubr.f32.gmra.mrb[0].mxu0 %v155
    %v223 = vpop.f32.mrb[0].mxu0
    %v224 = vadd.f32 0.0, %v223
    %v225 = vpop.f32.mrb[0].mxu0
    %226 = vdwg.mxu0
    %v227 = vadd.f32 %v149, %v224
    %v228 = vld [vmem:[%s5] sm:$0x1]
    %v230 = vlaneseq
    %v231 = vshrl.u32 %v230, 7
    %v232 = vsub.s32 0, %v231
    %v233 = vrot.slane %v228, %v232
    %v235 = vadd.f32 %v227, %v233
    %236 = vst [vmem:[#allocation8] sm:$0xff] %v235
    // Predicated region
    $region38: #{tpu_custom_call.1} parent=1 // pred_check
      _
    $region39: #{tpu_custom_call.1} parent=1 // pred_check_branch
      %238 = sbr.rel (0) target = $region41
    $region40: #{tpu_custom_call.1} parent=1 // pred_region
      %s240 = ssub.s32 128, 128
      %241 = vsyncadd [#allocation4], %s240
      %s243 = sshll.u32 [#allocation8], 4
      %s244 = int_to_ptr.vmem [resolvable:$true] %s243
      %246 = dma.vmem_to_hbm [thread:$0]  %s244, 128, %s6, [#allocation4]
    $region41: #{tpu_custom_call.1} parent=1 // pred_fallthru
      _
    // Predicated region
    $region42: #{tpu_custom_call.1} parent=1 // pred_check
      _
    $region43: #{tpu_custom_call.1} parent=1 // pred_check_branch
      %248 = sbr.rel (0) target = $region45
    $region44: #{tpu_custom_call.1} parent=1 // pred_region
      %249 = dma.done [#allocation4], 128
    $region45: #{tpu_custom_call.1} parent=1 // pred_fallthru
      _
    %250 = vsyncpa [#allocation3], 1
    %251 = vsyncpa [#allocation6], 1
    %252 = vsyncpa [#allocation4], 1

</llo_original>
